<compile_context>
chip_gen: v5e
topology: v5e:2x2
jax: 0.10.0
libtpu: 0.0.40
codegen_flags: <defaults>
</compile_context>

<pallas_src>
import functools

import jax
import jax.numpy as jnp
from jax import lax
from jax.experimental import pallas as pl
from jax.experimental.pallas import tpu as pltpu


def _atom_ext_kernel(x_ref, o_ref, *, chs, ps, roll_shift, target):
    """Fused butterfly -> selective circular shift -> butterfly -> *0.5.

    The block is a 2D lane-dense slab (sublanes, L).  The lane axis is the
    flattened (cols, chs) axis (Right/Left) or (rows, cols, chs) axis (Down/Up),
    so every circular shift of this layer is a lane rotation (XLU), and the
    sum/difference halves live interleaved in groups of `chs` lanes.
    """
    x = x_ref[...].astype(jnp.float32)
    ax = x.ndim - 1
    L = x.shape[-1]

    # Per-lane position inside its chs-wide pixel group.
    lane = lax.broadcasted_iota(jnp.int32, x.shape, dimension=ax)
    if chs & (chs - 1) == 0:
        in_group = jnp.bitwise_and(lane, chs - 1)
    else:
        in_group = lane % chs
    is_sum = in_group < ps                                   # first half of group
    sign = jnp.where(is_sum, 1.0, -1.0).astype(x.dtype)

    def half_swap(v):
        # Butterfly partner: lane+ps for sum lanes, lane-ps for difference lanes.
        # (Wrap-around lanes are never selected, so no cross-group contamination.)
        fwd = pltpu.roll(v, (L - ps) % L, ax)                # v[lane + ps]
        bwd = pltpu.roll(v, ps % L, ax)                      # v[lane - ps]
        return jnp.where(is_sum, fwd, bwd)

    # --- first block butterfly: sum lanes <- Xs+Xa, diff lanes <- Xs-Xa ---
    y = half_swap(x) + sign * x

    # --- circular block shift of the target half (single lane rotation) ---
    rolled = pltpu.roll(y, roll_shift % L, ax)
    if target == 0:                        # 'Difference' -> shift the diff half
        y = jnp.where(is_sum, y, rolled)
    else:                                  # 'Sum'        -> shift the sum half
        y = jnp.where(is_sum, rolled, y)

    # --- second block butterfly, halved ---
    out = (half_swap(y) + sign * y) * 0.5
    o_ref[...] = out.astype(o_ref.dtype)


class LsunAtomExtension2dLayer:
    """JAX/Pallas port of the PyTorch LsunAtomExtension2dLayer (forward only)."""

    def __init__(self, name='', stride=(2, 2), direction='', target_channels=''):
        if target_channels not in {'Sum', 'Difference'}:
            raise ValueError('Target should be either of Sum or Difference')
        if direction not in {'Right', 'Left', 'Down', 'Up'}:
            raise ValueError('Direction should be either of Right, Left, Down or Up')
        self.name = name
        self.stride = tuple(stride)
        self.direction = direction
        self.target_channels = target_channels
        n_chs_total = self.stride[0] * self.stride[1]
        ps = n_chs_total // 2 + n_chs_total % 2
        pa = n_chs_total // 2
        self.description = (direction + ' shift the ' + target_channels.lower()
                            + '-channel Coefs. (ps,pa) = (' + str(ps) + ',' + str(pa) + ')')
        # No learnable parameters in this layer.

    def __call__(self, x):
        n, rows, cols, chs = x.shape
        n_chs_total = self.stride[0] * self.stride[1]
        assert chs == n_chs_total, "channel dim must equal stride[0]*stride[1]"
        ps = n_chs_total // 2 + n_chs_total % 2
        pa = n_chs_total // 2
        if ps != pa:
            # The PyTorch forward also fails for ps != pa (Xs + Xa shape mismatch).
            raise ValueError("block butterfly requires an even channel count (ps == pa)")

        target = 0 if self.target_channels == 'Difference' else 1
        shift_row, shift_col = {'Right': (0, 1), 'Left': (0, -1),
                                'Down': (1, 0), 'Up': (-1, 0)}[self.direction]

        # Zero-copy lane-dense 2D view; the rolled axis is entirely inside the
        # lane dimension, so the circular wrap is exactly torch.roll's wrap.
        if self.direction in ('Right', 'Left'):
            M, L = n * rows, cols * chs              # col roll wraps within a row
            roll_shift = shift_col * chs
        else:
            M, L = n, rows * cols * chs              # row roll wraps within a sample
            roll_shift = shift_row * cols * chs
        xv = x.reshape(M, L)

        # Block sizing: whole lane axis (it is rolled), big sublane tiles (~2 MiB)
        # so the 0.35 us/step pipeline overhead amortizes; fits 2 arrays x 2 bufs
        # comfortably inside the default scoped VMEM on v5e/v6e/v7x.
        itemsize = x.dtype.itemsize
        target_block_bytes = 2 * 1024 * 1024
        if M * L * itemsize <= target_block_bytes:
            bm = M                                    # full dim: always legal
        else:
            bm = max(8, (target_block_bytes // (L * itemsize)) // 8 * 8)
            bm = min(bm, M)
        grid = (pl.cdiv(M, bm),)

        kernel = functools.partial(_atom_ext_kernel, chs=chs, ps=ps,
                                   roll_shift=roll_shift, target=target)

        out = pl.pallas_call(
            kernel,
            out_shape=jax.ShapeDtypeStruct((M, L), x.dtype),
            grid=grid,
            in_specs=[pl.BlockSpec((bm, L), lambda i: (i, 0))],
            out_specs=pl.BlockSpec((bm, L), lambda i: (i, 0)),
            compiler_params=pltpu.CompilerParams(
                dimension_semantics=("parallel",)),
        )(xv)

        return out.reshape(n, rows, cols, chs)


def _reference_forward(x, stride, direction, target_channels):
    """Pure-JAX reference replicating the PyTorch forward exactly."""
    n_chs_total = stride[0] * stride[1]
    ps = n_chs_total // 2 + n_chs_total % 2

    def butterfly(v):
        vs, va = v[..., :ps], v[..., ps:]
        return jnp.concatenate([vs + va, vs - va], axis=-1)

    shift4 = {'Right': (0, 0, 1, 0), 'Left': (0, 0, -1, 0),
              'Down': (0, 1, 0, 0), 'Up': (0, -1, 0, 0)}[direction]

    y = butterfly(x)
    if target_channels == 'Difference':
        y = y.at[..., ps:].set(jnp.roll(y[..., ps:], shift4, axis=(0, 1, 2, 3)))
    else:
        y = y.at[..., :ps].set(jnp.roll(y[..., :ps], shift4, axis=(0, 1, 2, 3)))
    return butterfly(y) / 2.0


if __name__ == "__main__":
    key = jax.random.PRNGKey(0)
    # nSamples x nRows x nCols x nChs, with nChs = stride_v * stride_h = 4.
    batch, rows, cols = 2, 16, 32
    stride = (2, 2)
    n_chs = stride[0] * stride[1]
    x = jax.random.normal(key, (batch, rows, cols, n_chs), dtype=jnp.float32)

    for direction in ('Right', 'Left', 'Down', 'Up'):
        for target in ('Difference', 'Sum'):
            layer = LsunAtomExtension2dLayer(name='E0', stride=stride,
                                             direction=direction,
                                             target_channels=target)
            out = jax.block_until_ready(layer(x))
            ref = _reference_forward(x, stride, direction, target)
            assert out.shape == x.shape and out.dtype == x.dtype
            assert jnp.allclose(out, ref, atol=1e-5, rtol=1e-5), \
                f"Pallas kernel mismatch vs reference ({direction}, {target})"

    print("KERNEL_OK")
</pallas_src>

<mosaic_0001>
module attributes {stable_mosaic.version = 11 : i64} {
  func.func @_atom_ext_kernel(%arg0: i32, %arg1: memref<32x128xf32, #tpu.memory_space<vmem>>, %arg2: memref<32x128xf32, #tpu.memory_space<vmem>>) attributes {dimension_semantics = [#tpu.dimension_semantics<parallel>], iteration_bounds = array<i64: 1>, scalar_prefetch = 0 : i64, scratch_operands = 0 : i64, tpu.core_type = #tpu.core_type<tc>, window_params = [{transform_indices = @transform_0, window_bounds = array<i64: 32, 128>}, {transform_indices = @transform_1, window_bounds = array<i64: 32, 128>}]} {
    %c0 = arith.constant 0 : index
    %c0_0 = arith.constant 0 : index
    %0 = vector.load %arg1[%c0, %c0_0] : memref<32x128xf32, #tpu.memory_space<vmem>>, vector<32x128xf32>
    %1 = tpu.iota {dimensions = array<i32: 1>} : vector<32x128xi32>
    %c3_i32 = arith.constant 3 : i32
    %2 = vector.broadcast %c3_i32 : i32 to vector<32x128xi32>
    %3 = arith.andi %1, %2 : vector<32x128xi32>
    %c2_i32 = arith.constant 2 : i32
    %4 = vector.broadcast %c2_i32 : i32 to vector<32x128xi32>
    %5 = arith.cmpi slt, %3, %4 : vector<32x128xi32>
    %cst = arith.constant 1.000000e+00 : f32
    %cst_1 = arith.constant -1.000000e+00 : f32
    %6 = vector.broadcast %cst : f32 to vector<32x128xf32>
    %7 = vector.broadcast %cst_1 : f32 to vector<32x128xf32>
    %8 = arith.select %5, %6, %7 : vector<32x128xi1>, vector<32x128xf32>
    %c126_i32 = arith.constant 126 : i32
    %9 = tpu.dynamic_rotate %0 by %c126_i32 dim 1 : vector<32x128xf32>, i32 -> vector<32x128xf32>
    %c2_i32_2 = arith.constant 2 : i32
    %10 = tpu.dynamic_rotate %0 by %c2_i32_2 dim 1 : vector<32x128xf32>, i32 -> vector<32x128xf32>
    %11 = arith.select %5, %9, %10 : vector<32x128xi1>, vector<32x128xf32>
    %12 = arith.mulf %8, %0 : vector<32x128xf32>
    %13 = arith.addf %11, %12 : vector<32x128xf32>
    %c4_i32 = arith.constant 4 : i32
    %14 = tpu.dynamic_rotate %13 by %c4_i32 dim 1 : vector<32x128xf32>, i32 -> vector<32x128xf32>
    %15 = arith.select %5, %13, %14 : vector<32x128xi1>, vector<32x128xf32>
    %c126_i32_3 = arith.constant 126 : i32
    %16 = tpu.dynamic_rotate %15 by %c126_i32_3 dim 1 : vector<32x128xf32>, i32 -> vector<32x128xf32>
    %c2_i32_4 = arith.constant 2 : i32
    %17 = tpu.dynamic_rotate %15 by %c2_i32_4 dim 1 : vector<32x128xf32>, i32 -> vector<32x128xf32>
    %18 = arith.select %5, %16, %17 : vector<32x128xi1>, vector<32x128xf32>
    %19 = arith.mulf %8, %15 : vector<32x128xf32>
    %20 = arith.addf %18, %19 : vector<32x128xf32>
    %cst_5 = arith.constant 5.000000e-01 : f32
    %21 = vector.broadcast %cst_5 : f32 to vector<32x128xf32>
    %22 = arith.mulf %20, %21 : vector<32x128xf32>
    %c0_6 = arith.constant 0 : index
    %c0_7 = arith.constant 0 : index
    %23 = vector.load %arg2[%c0_6, %c0_7] : memref<32x128xf32, #tpu.memory_space<vmem>>, vector<32x128xf32>
    tpu.vector_store %arg2[%c0_6, %c0_7], %22 {strides = array<i32>} : memref<32x128xf32, #tpu.memory_space<vmem>>, vector<32x128xf32>,
    return
  }
  func.func @transform_0(%arg0: i32) -> (i32, i32) {
    %c0_i32 = arith.constant 0 : i32
    %c0_i32_0 = arith.constant 0 : i32
    return %arg0, %c0_i32 : i32, i32
  }
  func.func @transform_1(%arg0: i32) -> (i32, i32) {
    %c0_i32 = arith.constant 0 : i32
    %c0_i32_0 = arith.constant 0 : i32
    return %arg0, %c0_i32 : i32, i32
  }
}

</mosaic_0001>

<llo_original>
// kernel: tpu_custom_call.1
$region0: #{tpu_custom_call.1}
  #allocation0 [shape = 'u32[]', space=smem, size = 0x4, offset = 0x4, fixed_abs, tag = 'smem constant byte address 0x4 - core index']
  #allocation1 [shape = 'u32[72,128]{1,0:T(1,128)}', space=vmem, size = 0x9000, scoped, tag = 'internal scratch']
  %s0 = inlined_call_operand.hbm [shape: f32[32,128], index: 0, kind: input, shape index: {}]
  %s1 = inlined_call_operand.hbm [shape: f32[32,128], index: 1, kind: output, shape index: {}]
  %s2 = sld [smem:[#allocation0]]
  $region18: #{tpu_custom_call.1} parent=0
    _
  %s4 = ssub.s32 1, %s2
  %s5 = scalar_select 0, %s4, %s2
  $region1: #{tpu_custom_call.1} parent=0
    #allocation2 [shape = 'u8[16384]{0}', space=vmem, size = 0x4000, scoped, tag = 'input window, operand 0, single buffered']
    #allocation3 [shape = 's32[1]{0}', space=sflag, size = 0x4, scoped, tag = 'scoped memory for tpu_custom_call.1']
    #allocation4 [shape = 's32[1]{0}', space=sflag, size = 0x4, scoped, tag = 'scoped memory for tpu_custom_call.1']
    #allocation5 [shape = 'u8[16384]{0}', space=vmem, size = 0x4000, scoped, tag = 'output window, operand 0, single buffered']
    %6 = vsyncpa [#allocation3], 0
    %7 = vsyncpa [#allocation4], 0
    // Predicated region
    $region2: #{tpu_custom_call.1} parent=1 // pred_check
      _
    $region3: #{tpu_custom_call.1} parent=1 // pred_check_branch
      %9 = sbr.rel (0) target = $region5
    $region4: #{tpu_custom_call.1} parent=1 // pred_region
      %11 = vsyncadd [#allocation3], 0
      %s12 = sshll.u32 %s0, 4
      %s13 = int_to_ptr.hbm [resolvable:$true] %s12
      %s14 = sshll.u32 [#allocation2], 4
      %s15 = int_to_ptr.vmem [resolvable:$true] %s14
      %20 = dma.hbm_to_vmem [thread:$0]  %s13, 512, %s15, [#allocation3], 128, 128, 8
    $region5: #{tpu_custom_call.1} parent=1 // pred_fallthru
      _
    // Predicated region
    $region6: #{tpu_custom_call.1} parent=1 // pred_check
      _
    $region7: #{tpu_custom_call.1} parent=1 // pred_check_branch
      %22 = sbr.rel (0) target = $region9
    $region8: #{tpu_custom_call.1} parent=1 // pred_region
      %24 = dma.done [#allocation3], 512
    $region9: #{tpu_custom_call.1} parent=1 // pred_fallthru
      _
    %v25 = vld [vmem:[#allocation2] sm:$0xff]
    %v26 = vld [vmem:[#allocation2 + $0x8] sm:$0xff]
    %v27 = vld [vmem:[#allocation2 + $0x10] sm:$0xff]
    %v28 = vld [vmem:[#allocation2 + $0x18] sm:$0xff]
    %v29 = vlaneseq
    %v30 = vand.u32 %v29, 127
    %v31 = vand.u32 %v30, 3
    %vm32 = vcmp.lt.s32.totalorder %v31, 2
    %v33 = vsel %vm32, 1.0, -1.0
    %34 = vrot.lane.b32.xlu0 %v25, 126
    %v35 = vpop.permute.xlu0 %34
    %36 = vrot.lane.b32.xlu0 %v26, 126
    %v37 = vpop.permute.xlu0 %36
    %38 = vrot.lane.b32.xlu0 %v27, 126
    %v39 = vpop.permute.xlu0 %38
    %40 = vrot.lane.b32.xlu0 %v28, 126
    %v41 = vpop.permute.xlu0 %40
    %42 = vrot.lane.b32.xlu0 %v25, 2
    %v43 = vpop.permute.xlu0 %42
    %44 = vrot.lane.b32.xlu0 %v26, 2
    %v45 = vpop.permute.xlu0 %44
    %46 = vrot.lane.b32.xlu0 %v27, 2
    %v47 = vpop.permute.xlu0 %46
    %48 = vrot.lane.b32.xlu0 %v28, 2
    %v49 = vpop.permute.xlu0 %48
    %v50 = vsel %vm32, %v35, %v43
    %v51 = vsel %vm32, %v37, %v45
    %v52 = vsel %vm32, %v39, %v47
    %v53 = vsel %vm32, %v41, %v49
    %v54 = vmul.f32 %v33, %v25
    %v55 = vmul.f32 %v33, %v26
    %v56 = vmul.f32 %v33, %v27
    %v57 = vmul.f32 %v33, %v28
    %v58 = vadd.f32 %v50, %v54
    %v59 = vadd.f32 %v51, %v55
    %v60 = vadd.f32 %v52, %v56
    %v61 = vadd.f32 %v53, %v57
    %62 = vrot.lane.b32.xlu0 %v58, 4
    %v63 = vpop.permute.xlu0 %62
    %64 = vrot.lane.b32.xlu0 %v59, 4
    %v65 = vpop.permute.xlu0 %64
    %66 = vrot.lane.b32.xlu0 %v60, 4
    %v67 = vpop.permute.xlu0 %66
    %68 = vrot.lane.b32.xlu0 %v61, 4
    %v69 = vpop.permute.xlu0 %68
    %v70 = vsel %vm32, %v58, %v63
    %v71 = vsel %vm32, %v59, %v65
    %v72 = vsel %vm32, %v60, %v67
    %v73 = vsel %vm32, %v61, %v69
    %74 = vrot.lane.b32.xlu0 %v70, 126
    %v75 = vpop.permute.xlu0 %74
    %76 = vrot.lane.b32.xlu0 %v71, 126
    %v77 = vpop.permute.xlu0 %76
    %78 = vrot.lane.b32.xlu0 %v72, 126
    %v79 = vpop.permute.xlu0 %78
    %80 = vrot.lane.b32.xlu0 %v73, 126
    %v81 = vpop.permute.xlu0 %80
    %82 = vrot.lane.b32.xlu0 %v70, 2
    %v83 = vpop.permute.xlu0 %82
    %84 = vrot.lane.b32.xlu0 %v71, 2
    %v85 = vpop.permute.xlu0 %84
    %86 = vrot.lane.b32.xlu0 %v72, 2
    %v87 = vpop.permute.xlu0 %86
    %88 = vrot.lane.b32.xlu0 %v73, 2
    %v89 = vpop.permute.xlu0 %88
    %v90 = vsel %vm32, %v75, %v83
    %v91 = vsel %vm32, %v77, %v85
    %v92 = vsel %vm32, %v79, %v87
    %v93 = vsel %vm32, %v81, %v89
    %v94 = vmul.f32 %v33, %v70
    %v95 = vmul.f32 %v33, %v71
    %v96 = vmul.f32 %v33, %v72
    %v97 = vmul.f32 %v33, %v73
    %v98 = vadd.f32 %v90, %v94
    %v99 = vadd.f32 %v91, %v95
    %v100 = vadd.f32 %v92, %v96
    %v101 = vadd.f32 %v93, %v97
    %v102 = vmul.f32 %v98, 0.5
    %v103 = vmul.f32 %v99, 0.5
    %v104 = vmul.f32 %v100, 0.5
    %v105 = vmul.f32 %v101, 0.5
    %106 = vst [vmem:[#allocation5] sm:$0xff] %v102
    %107 = vst [vmem:[#allocation5 + $0x8] sm:$0xff] %v103
    %108 = vst [vmem:[#allocation5 + $0x10] sm:$0xff] %v104
    %109 = vst [vmem:[#allocation5 + $0x18] sm:$0xff] %v105
    // Predicated region
    $region10: #{tpu_custom_call.1} parent=1 // pred_check
      _
    $region11: #{tpu_custom_call.1} parent=1 // pred_check_branch
      %111 = sbr.rel (0) target = $region13
    $region12: #{tpu_custom_call.1} parent=1 // pred_region
      %113 = vsyncadd [#allocation4], 0
      %s114 = sshll.u32 [#allocation5], 4
      %s115 = int_to_ptr.vmem [resolvable:$true] %s114
      %s116 = sshll.u32 %s1, 4
      %s117 = int_to_ptr.hbm [resolvable:$true] %s116
      %122 = dma.vmem_to_hbm [thread:$0]  %s115, 512, %s117, [#allocation4], 128, 128, 8
    $region13: #{tpu_custom_call.1} parent=1 // pred_fallthru
      _
    // Predicated region
    $region14: #{tpu_custom_call.1} parent=1 // pred_check
      _
    $region15: #{tpu_custom_call.1} parent=1 // pred_check_branch
      %124 = sbr.rel (0) target = $region17
    $region16: #{tpu_custom_call.1} parent=1 // pred_region
      %126 = dma.done [#allocation4], 512
    $region17: #{tpu_custom_call.1} parent=1 // pred_fallthru
      _
    %127 = vsyncpa [#allocation3], 1
    %128 = vsyncpa [#allocation4], 1

</llo_original>
